<compile_context>
chip_gen: v6e
topology: v6e:2x2x1
jax: 0.10.0
libtpu: 0.0.40
codegen_flags: <defaults>
</compile_context>

<pallas_src>
import jax
import jax.numpy as jnp
from jax import lax
from jax.experimental import pallas as pl
from jax.experimental.pallas import tpu as pltpu

# --- model sizes (small synthetic stand-in, forward-consistent) ---------------
BATCH = 2
SEQ = 8
VOCAB = 100
HIDDEN = 32            # bert.config.hidden_size
LEX = 6                # lexicon_features_dim
FF = 512               # feature_combiner output dim
NUM_CLASSES = 6

# --- TPU-friendly padded sizes -------------------------------------------------
B_PAD = 16             # bf16 vreg packs (16,128) sublanes x lanes
K_IN = HIDDEN + LEX    # 38: concat([cls_hidden, lexicon_features]) feature dim
K_PAD = 128            # contraction dim padded to a full lane width
OUT_PAD = 8            # real logits live in lanes [0, 6); 8 keeps it tiny


def emotion_head_kernel(x_ref, wp_ref, bp_ref, w1_ref, b1_ref, w2_ref, b2_ref,
                        out_ref):
    """Fused BertPooler(dense+tanh) -> concat -> Linear -> ReLU -> Linear.

    x_ref:  (B_PAD, K_PAD) bf16 = concat([cls_hidden, lexicon_features]) padded
    wp_ref: (K_PAD, K_PAD) bf16 extended pooler weight [[Wp,0],[0,I_6],[0,0]]
            so  x @ wp_ext = [cls @ Wp | lex | 0...]  in one MXU pass.
    tanh is then applied only to the first HIDDEN lanes (lane mask), exactly
    reproducing concat([tanh(cls @ Wp + bp), lex]) with no in-kernel lane
    concatenation and no separate K=6 matmul.
    Dropout(p=0.3) layers are identity at inference (module.eval()).
    All elementwise math is f32; bf16 is used only as MXU operand dtype.
    """
    # --- BertPooler + passthrough of lexicon lanes (dot #1) ---
    pre = (jnp.dot(x_ref[...], wp_ref[...], preferred_element_type=jnp.float32)
           + bp_ref[...])                                     # (B_PAD, K_PAD) f32
    lane = lax.broadcasted_iota(jnp.int32, pre.shape, dimension=1)
    combined = jnp.where(lane < HIDDEN, jnp.tanh(pre), pre)   # [pooled | lex | 0]

    # --- feature_combiner: Linear(H+6, 512) + ReLU (dot #2) ---
    h = (jnp.dot(combined.astype(jnp.bfloat16), w1_ref[...],
                 preferred_element_type=jnp.float32)
         + b1_ref[...])
    h = jnp.maximum(h, 0.0)

    # --- classifier: Linear(512, 6), padded to 8 output lanes (dot #3) ---
    out_ref[...] = (jnp.dot(h.astype(jnp.bfloat16), w2_ref[...],
                            preferred_element_type=jnp.float32)
                    + b2_ref[...])


def _head_pallas(x_padded, kparams):
    """Single-grid-point fused head; weights stay VMEM-resident."""
    full = lambda a: pl.BlockSpec(a.shape, lambda: tuple(0 for _ in a.shape))
    args = (x_padded, kparams["wp"], kparams["bp"], kparams["w1"],
            kparams["b1"], kparams["w2"], kparams["b2"])

    out_bytes = B_PAD * OUT_PAD * 4
    in_bytes = sum(int(a.size) * a.dtype.itemsize for a in args)
    cost = pl.CostEstimate(
        flops=2 * (B_PAD * K_PAD * K_PAD + B_PAD * K_PAD * FF
                   + B_PAD * FF * OUT_PAD),
        transcendentals=B_PAD * HIDDEN,          # tanh on the pooled lanes
        bytes_accessed=in_bytes + out_bytes,
    )

    # NOTE: for real serving batches, tile the batch axis with grid=(B//TM,),
    # dimension_semantics=("parallel",) (TM=128 on v5e, 256 on v6e/v7x) and
    # constant-index weight BlockSpecs so both v7x TensorCores are used and
    # activation tiles are double-buffered.
    return pl.pallas_call(
        emotion_head_kernel,
        out_shape=jax.ShapeDtypeStruct((B_PAD, OUT_PAD), jnp.float32),
        grid=(),
        in_specs=[full(a) for a in args],
        out_specs=pl.BlockSpec((B_PAD, OUT_PAD), lambda: (0, 0)),
        compiler_params=pltpu.CompilerParams(
            vmem_limit_bytes=4 * 1024 * 1024),   # live data is a few hundred KiB
        cost_estimate=cost,
    )(*args)


@jax.jit
def emotion_classifier_head(cls_hidden, lexicon_features, kparams):
    """Jitted wrapper: concat once, pad batch->16 rows and K->128 lanes, cast
    to bf16, run the fused kernel, slice back to (batch, 6).  Everything
    (pad / concat / cast / pallas_call / slice) fuses under one XLA program."""
    b = cls_hidden.shape[0]
    x = jnp.concatenate([cls_hidden, lexicon_features], axis=1)       # (B, 38)
    x = jnp.pad(x, ((0, B_PAD - b), (0, K_PAD - K_IN)))               # (16, 128)
    out = _head_pallas(x.astype(jnp.bfloat16), kparams)
    return out[:b, :NUM_CLASSES]


def bert_surrogate(input_ids, attention_mask, embedding_table):
    """Deterministic stand-in for the external BERT encoder: returns a
    [CLS]-style hidden state = last_hidden_state[:, 0] (what BertPooler reads).
    Gathers only the [CLS] row (no [B,S,H] intermediate).
    # TODO(synk): the full pretrained BERT transformer encoder is an external
    # module and is not replicated here; only its pooler is fused in the kernel.
    """
    del attention_mask
    return embedding_table[input_ids[:, 0]]   # [B, H]  ([CLS] position)


def init_params(key):
    ks = jax.random.split(key, 4)
    scale = 0.02
    return {
        "emb": scale * jax.random.normal(ks[0], (VOCAB, HIDDEN), jnp.float32),
        "wp":  scale * jax.random.normal(ks[1], (HIDDEN, HIDDEN), jnp.float32),
        "bp":  jnp.zeros((HIDDEN,), jnp.float32),
        "w1":  scale * jax.random.normal(ks[2], (HIDDEN + LEX, FF), jnp.float32),
        "b1":  jnp.zeros((FF,), jnp.float32),
        "w2":  scale * jax.random.normal(ks[3], (FF, NUM_CLASSES), jnp.float32),
        "b2":  jnp.zeros((NUM_CLASSES,), jnp.float32),
    }


def prepare_kernel_params(params):
    """One-time weight packing (hoisted out of the per-call path):
       * extended pooler weight [[Wp,0],[0,I6],[0,0]] padded to (128,128) so the
         lexicon lanes pass through dot #1 unchanged and every MXU operand is
         (sublane,128)-aligned (removes the K=6 matmul and masked layouts),
       * w1 zero-padded to 128 contraction rows,
       * classifier weight/bias padded only to 8 output lanes (not 128),
       * matmul weights cast to bf16 (f32 accumulation in-kernel)."""
    wp_ext = jnp.zeros((K_PAD, K_PAD), jnp.float32)
    wp_ext = wp_ext.at[:HIDDEN, :HIDDEN].set(params["wp"])
    wp_ext = wp_ext.at[HIDDEN:K_IN, HIDDEN:K_IN].set(jnp.eye(LEX, dtype=jnp.float32))
    bp_ext = jnp.zeros((1, K_PAD), jnp.float32).at[0, :HIDDEN].set(params["bp"])

    w1_pad = jnp.zeros((K_PAD, FF), jnp.float32).at[:K_IN, :].set(params["w1"])

    w2_pad = jnp.zeros((FF, OUT_PAD), jnp.float32).at[:, :NUM_CLASSES].set(params["w2"])
    b2_pad = jnp.zeros((1, OUT_PAD), jnp.float32).at[0, :NUM_CLASSES].set(params["b2"])

    return {
        "wp": wp_ext.astype(jnp.bfloat16),
        "bp": bp_ext,                              # f32, added after f32 dot
        "w1": w1_pad.astype(jnp.bfloat16),
        "b1": params["b1"].reshape(1, FF),
        "w2": w2_pad.astype(jnp.bfloat16),
        "b2": b2_pad,
    }


def reference_forward(cls_hidden, lexicon_features, params):
    """Pure-JAX f32 reference of the module's own forward (post-BERT)."""
    pooled = jnp.tanh(cls_hidden @ params["wp"] + params["bp"])
    combined = jnp.concatenate([pooled, lexicon_features], axis=1)
    h = jnp.maximum(combined @ params["w1"] + params["b1"], 0.0)
    return h @ params["w2"] + params["b2"]


if __name__ == "__main__":
    key = jax.random.PRNGKey(0)
    kp, ki, kl = jax.random.split(key, 3)

    params = init_params(kp)
    kparams = prepare_kernel_params(params)        # hoisted, once per model

    input_ids = jax.random.randint(ki, (BATCH, SEQ), 0, VOCAB, dtype=jnp.int32)
    attention_mask = jnp.ones((BATCH, SEQ), dtype=jnp.int32)
    lexicon_features = jax.random.uniform(kl, (BATCH, LEX), dtype=jnp.float32)

    cls_hidden = bert_surrogate(input_ids, attention_mask, params["emb"])
    logits = emotion_classifier_head(cls_hidden, lexicon_features, kparams)
    logits = jax.block_until_ready(logits)

    assert logits.shape == (BATCH, NUM_CLASSES)
    assert logits.dtype == jnp.float32

    ref = reference_forward(cls_hidden, lexicon_features, params)
    assert jnp.allclose(logits, ref, rtol=0.1, atol=0.05), (
        f"max abs diff {jnp.max(jnp.abs(logits - ref))}")

    print("KERNEL_OK")
</pallas_src>

<mosaic_0001>
module attributes {stable_mosaic.version = 11 : i64} {
  func.func @emotion_head_kernel(%arg0: memref<16x128xbf16, #tpu.memory_space<vmem>>, %arg1: memref<128x128xbf16, #tpu.memory_space<vmem>>, %arg2: memref<1x128xf32, #tpu.memory_space<vmem>>, %arg3: memref<128x512xbf16, #tpu.memory_space<vmem>>, %arg4: memref<1x512xf32, #tpu.memory_space<vmem>>, %arg5: memref<512x8xbf16, #tpu.memory_space<vmem>>, %arg6: memref<1x8xf32, #tpu.memory_space<vmem>>, %arg7: memref<16x8xf32, #tpu.memory_space<vmem>>) attributes {dimension_semantics = [], scalar_prefetch = 0 : i64, scratch_operands = 0 : i64, tpu.core_type = #tpu.core_type<tc>} {
    %c0 = arith.constant 0 : index
    %c0_0 = arith.constant 0 : index
    %0 = vector.load %arg0[%c0, %c0_0] : memref<16x128xbf16, #tpu.memory_space<vmem>>, vector<16x128xbf16>
    %c0_1 = arith.constant 0 : index
    %c0_2 = arith.constant 0 : index
    %1 = vector.load %arg1[%c0_1, %c0_2] : memref<128x128xbf16, #tpu.memory_space<vmem>>, vector<128x128xbf16>
    %cst = arith.constant dense<0.000000e+00> : vector<16x128xf32>
    %2 = tpu.matmul %0, %1, %cst {dimension_numbers = #tpu.dot_dimension_numbers<[1], [0], [0], [1], [0, 0, 1, 1], [], []>} : vector<16x128xbf16>, vector<128x128xbf16>, vector<16x128xf32> -> vector<16x128xf32>
    %c0_3 = arith.constant 0 : index
    %c0_4 = arith.constant 0 : index
    %3 = vector.load %arg2[%c0_3, %c0_4] : memref<1x128xf32, #tpu.memory_space<vmem>>, vector<1x128xf32>
    %4 = vector.broadcast %3 : vector<1x128xf32> to vector<16x128xf32>
    %5 = arith.addf %2, %4 : vector<16x128xf32>
    %6 = tpu.iota {dimensions = array<i32: 1>} : vector<16x128xi32>
    %c32_i32 = arith.constant 32 : i32
    %7 = vector.broadcast %c32_i32 : i32 to vector<16x128xi32>
    %8 = arith.cmpi slt, %6, %7 : vector<16x128xi32>
    %9 = math.tanh %5 : vector<16x128xf32>
    %10 = arith.select %8, %9, %5 : vector<16x128xi1>, vector<16x128xf32>
    %11 = arith.truncf %10 : vector<16x128xf32> to vector<16x128xbf16>
    %c0_5 = arith.constant 0 : index
    %c0_6 = arith.constant 0 : index
    %12 = vector.load %arg3[%c0_5, %c0_6] : memref<128x512xbf16, #tpu.memory_space<vmem>>, vector<128x512xbf16>
    %cst_7 = arith.constant dense<0.000000e+00> : vector<16x512xf32>
    %13 = tpu.matmul %11, %12, %cst_7 {dimension_numbers = #tpu.dot_dimension_numbers<[1], [0], [0], [1], [0, 0, 1, 1], [], []>} : vector<16x128xbf16>, vector<128x512xbf16>, vector<16x512xf32> -> vector<16x512xf32>
    %c0_8 = arith.constant 0 : index
    %c0_9 = arith.constant 0 : index
    %14 = vector.load %arg4[%c0_8, %c0_9] : memref<1x512xf32, #tpu.memory_space<vmem>>, vector<1x512xf32>
    %15 = vector.broadcast %14 : vector<1x512xf32> to vector<16x512xf32>
    %16 = arith.addf %13, %15 : vector<16x512xf32>
    %cst_10 = arith.constant 0.000000e+00 : f32
    %17 = vector.broadcast %cst_10 : f32 to vector<16x512xf32>
    %18 = arith.maximumf %16, %17 : vector<16x512xf32>
    %19 = arith.truncf %18 : vector<16x512xf32> to vector<16x512xbf16>
    %c0_11 = arith.constant 0 : index
    %c0_12 = arith.constant 0 : index
    %20 = vector.load %arg5[%c0_11, %c0_12] : memref<512x8xbf16, #tpu.memory_space<vmem>>, vector<512x8xbf16>
    %cst_13 = arith.constant dense<0.000000e+00> : vector<16x8xf32>
    %21 = tpu.matmul %19, %20, %cst_13 {dimension_numbers = #tpu.dot_dimension_numbers<[1], [0], [0], [1], [0, 0, 1, 1], [], []>} : vector<16x512xbf16>, vector<512x8xbf16>, vector<16x8xf32> -> vector<16x8xf32>
    %c0_14 = arith.constant 0 : index
    %c0_15 = arith.constant 0 : index
    %22 = vector.load %arg6[%c0_14, %c0_15] : memref<1x8xf32, #tpu.memory_space<vmem>>, vector<1x8xf32>
    %23 = vector.broadcast %22 : vector<1x8xf32> to vector<16x8xf32>
    %24 = arith.addf %21, %23 : vector<16x8xf32>
    %c0_16 = arith.constant 0 : index
    %c0_17 = arith.constant 0 : index
    %25 = vector.load %arg7[%c0_16, %c0_17] : memref<16x8xf32, #tpu.memory_space<vmem>>, vector<16x8xf32>
    tpu.vector_store %arg7[%c0_16, %c0_17], %24 {strides = array<i32>} : memref<16x8xf32, #tpu.memory_space<vmem>>, vector<16x8xf32>,
    return
  }
}

</mosaic_0001>

<llo_original>
// kernel: emotion_classifier_head.1
$region0: #{emotion_classifier_head.1}
  #allocation0 [shape = 'u32[]', space=smem, size = 0x4, offset = 0x4, fixed_abs, tag = 'smem constant byte address 0x4 - core index']
  #allocation1 [shape = 'u32[144,128]{1,0:T(1,128)}', space=vmem, size = 0x12000, scoped, tag = 'internal scratch']
  %s0 = inlined_call_operand.vmem [shape: bf16[16,128], index: 0, kind: input, shape index: {}]
  %s1 = inlined_call_operand.hbm [shape: bf16[128,128], index: 1, kind: input, shape index: {}]
  %s2 = inlined_call_operand.vmem [shape: f32[1,128], index: 2, kind: input, shape index: {}]
  %s3 = inlined_call_operand.vmem [shape: bf16[128,512], index: 3, kind: input, shape index: {}]
  %s4 = inlined_call_operand.vmem [shape: f32[1,512], index: 4, kind: input, shape index: {}]
  %s5 = inlined_call_operand.vmem [shape: bf16[512,8], index: 5, kind: input, shape index: {}]
  %s6 = inlined_call_operand.vmem [shape: f32[1,8], index: 6, kind: input, shape index: {}]
  %s7 = inlined_call_operand.vmem [shape: f32[16,8], index: 7, kind: output, shape index: {}]
  %s8 = sld [smem:[#allocation0]]
  $region42: #{emotion_classifier_head.1} parent=0
    _
  %s10 = ssub.s32 1, %s8
  %s11 = scalar_select 0, %s10, %s8
  $region1: #{emotion_classifier_head.1} parent=0
    #allocation2 [shape = 'u8[32768]{0}', space=vmem, size = 0x8000, scoped, tag = 'input window, operand 1, single buffered']
    #allocation3 [shape = 's32[1]{0}', space=sflag, size = 0x4, scoped, tag = 'scoped memory for emotion_classifier_head.1']
    %12 = vsyncpa [#allocation3], 0
    // Predicated region
    $region2: #{emotion_classifier_head.1} parent=1 // pred_check
      _
    $region3: #{emotion_classifier_head.1} parent=1 // pred_check_branch
      %14 = sbr.rel (0) target = $region5
    $region4: #{emotion_classifier_head.1} parent=1 // pred_region
      _
    $region5: #{emotion_classifier_head.1} parent=1 // pred_fallthru
      _
    // Predicated region
    $region6: #{emotion_classifier_head.1} parent=1 // pred_check
      _
    $region7: #{emotion_classifier_head.1} parent=1 // pred_check_branch
      %16 = sbr.rel (0) target = $region9
    $region8: #{emotion_classifier_head.1} parent=1 // pred_region
      %s18 = ssub.s32 1024, 1024
      %19 = vsyncadd [#allocation3], %s18
      %s20 = sshll.u32 [#allocation2], 4
      %s21 = int_to_ptr.vmem [resolvable:$true] %s20
      %26 = dma.hbm_to_vmem [thread:$0]  %s1, 1024, %s21, [#allocation3], 64, 64, 4
    $region9: #{emotion_classifier_head.1} parent=1 // pred_fallthru
      _
    // Predicated region
    $region10: #{emotion_classifier_head.1} parent=1 // pred_check
      _
    $region11: #{emotion_classifier_head.1} parent=1 // pred_check_branch
      %28 = sbr.rel (0) target = $region13
    $region12: #{emotion_classifier_head.1} parent=1 // pred_region
      _
    $region13: #{emotion_classifier_head.1} parent=1 // pred_fallthru
      _
    // Predicated region
    $region14: #{emotion_classifier_head.1} parent=1 // pred_check
      _
    $region15: #{emotion_classifier_head.1} parent=1 // pred_check_branch
      %30 = sbr.rel (0) target = $region17
    $region16: #{emotion_classifier_head.1} parent=1 // pred_region
      _
    $region17: #{emotion_classifier_head.1} parent=1 // pred_fallthru
      _
    // Predicated region
    $region18: #{emotion_classifier_head.1} parent=1 // pred_check
      _
    $region19: #{emotion_classifier_head.1} parent=1 // pred_check_branch
      %32 = sbr.rel (0) target = $region21
    $region20: #{emotion_classifier_head.1} parent=1 // pred_region
      _
    $region21: #{emotion_classifier_head.1} parent=1 // pred_fallthru
      _
    // Predicated region
    $region22: #{emotion_classifier_head.1} parent=1 // pred_check
      _
    $region23: #{emotion_classifier_head.1} parent=1 // pred_check_branch
      %34 = sbr.rel (0) target = $region25
    $region24: #{emotion_classifier_head.1} parent=1 // pred_region
      _
    $region25: #{emotion_classifier_head.1} parent=1 // pred_fallthru
      _
    // Predicated region
    $region26: #{emotion_classifier_head.1} parent=1 // pred_check
      _
    $region27: #{emotion_classifier_head.1} parent=1 // pred_check_branch
      %36 = sbr.rel (0) target = $region29
    $region28: #{emotion_classifier_head.1} parent=1 // pred_region
      _
    $region29: #{emotion_classifier_head.1} parent=1 // pred_fallthru
      _
    // Predicated region
    $region30: #{emotion_classifier_head.1} parent=1 // pred_check
      _
    $region31: #{emotion_classifier_head.1} parent=1 // pred_check_branch
      %38 = sbr.rel (0) target = $region33
    $region32: #{emotion_classifier_head.1} parent=1 // pred_region
      %39 = dma.done [#allocation3], 1024
    $region33: #{emotion_classifier_head.1} parent=1 // pred_fallthru
      _
    %v41 = vld [vmem:[%s0] sm:$0xf]
    %v42 = vld [vmem:[%s0 + $0x4] sm:$0xf]
    %v43 = vld [vmem:[#allocation2] sm:$0xf]
    %v44 = vld [vmem:[#allocation2 + $0x4] sm:$0xf]
    %v45 = vld [vmem:[#allocation2 + $0x8] sm:$0xf]
    %v46 = vld [vmem:[#allocation2 + $0xc] sm:$0xf]
    %v47 = vld [vmem:[#allocation2 + $0x10] sm:$0xf]
    %v48 = vld [vmem:[#allocation2 + $0x14] sm:$0xf]
    %v49 = vld [vmem:[#allocation2 + $0x18] sm:$0xf]
    %v50 = vld [vmem:[#allocation2 + $0x1c] sm:$0xf]
    %v51 = vld [vmem:[#allocation2 + $0x20] sm:$0xf]
    %v52 = vld [vmem:[#allocation2 + $0x24] sm:$0xf]
    %v53 = vld [vmem:[#allocation2 + $0x28] sm:$0xf]
    %v54 = vld [vmem:[#allocation2 + $0x2c] sm:$0xf]
    %v55 = vld [vmem:[#allocation2 + $0x30] sm:$0xf]
    %v56 = vld [vmem:[#allocation2 + $0x34] sm:$0xf]
    %v57 = vld [vmem:[#allocation2 + $0x38] sm:$0xf]
    %v58 = vld [vmem:[#allocation2 + $0x3c] sm:$0xf]
    %v59 = vld [vmem:[%s2] sm:$0x1]
    %v61 = vlaneseq
    %v62 = vshrl.u32 %v61, 7
    %v63 = vsub.s32 0, %v62
    %v64 = vrot.slane %v59, %v63
    %v68 = vunpack.c.l.b16 %v41
    %v69 = vunpack.c.l.b16 %v42
    %v70 = vpack.c.b16 %v69, %v68
    %v88 = vunpack.c.l.b16 %v43
    %v89 = vunpack.c.l.b16 %v44
    %v90 = vunpack.c.l.b16 %v45
    %v91 = vunpack.c.l.b16 %v46
    %v92 = vunpack.c.l.b16 %v47
    %v93 = vunpack.c.l.b16 %v48
    %v94 = vunpack.c.l.b16 %v49
    %v95 = vunpack.c.l.b16 %v50
    %v96 = vunpack.c.l.b16 %v51
    %v97 = vunpack.c.l.b16 %v52
    %v98 = vunpack.c.l.b16 %v53
    %v99 = vunpack.c.l.b16 %v54
    %v100 = vunpack.c.l.b16 %v55
    %v101 = vunpack.c.l.b16 %v56
    %v102 = vunpack.c.l.b16 %v57
    %v103 = vunpack.c.l.b16 %v58
    %v104 = vpack.c.b16 %v89, %v88
    %v105 = vpack.c.b16 %v91, %v90
    %v106 = vpack.c.b16 %v93, %v92
    %v107 = vpack.c.b16 %v95, %v94
    %v108 = vpack.c.b16 %v97, %v96
    %v109 = vpack.c.b16 %v99, %v98
    %v110 = vpack.c.b16 %v101, %v100
    %v111 = vpack.c.b16 %v103, %v102
    %120 = vmatprep.subr.bf16.mxu0 0
    %121 = vmatpush1.bf16.msra.mxu0 %v111
    %122 = vmatprep.subr.bf16.mxu0 0
    %123 = vmatpush1.bf16.msra.mxu0 %v110
    %124 = vmatprep.subr.bf16.mxu0 0
    %125 = vmatpush1.bf16.msra.mxu0 %v109
    %126 = vmatprep.subr.bf16.mxu0 0
    %127 = vmatpush1.bf16.msra.mxu0 %v108
    %128 = vmatprep.subr.bf16.mxu0 0
    %129 = vmatpush1.bf16.msra.mxu0 %v107
    %130 = vmatprep.subr.bf16.mxu0 0
    %131 = vmatpush1.bf16.msra.mxu0 %v106
    %132 = vmatprep.subr.bf16.mxu0 0
    %133 = vmatpush1.bf16.msra.mxu0 %v105
    %134 = vmatprep.subr.bf16.mxu0 0
    %135 = vmatpush1.bf16.msra.mxu0 %v104
    %136 = vmatprep.subr.bf16.mxu0 0
    %137 = vmatpush2.bf16.msra.mxu0 0
    %138 = vmatprep.subr.bf16.mxu0 0
    %139 = vmatpush2.bf16.msra.mxu0 0
    %140 = vmatprep.subr.bf16.mxu0 0
    %141 = vmatpush2.bf16.msra.mxu0 0
    %142 = vmatprep.subr.bf16.mxu0 0
    %143 = vmatpush2.bf16.msra.mxu0 0
    %144 = vmatprep.subr.bf16.mxu0 0
    %145 = vmatpush2.bf16.msra.mxu0 0
    %146 = vmatprep.subr.bf16.mxu0 0
    %147 = vmatpush2.bf16.msra.mxu0 0
    %148 = vmatprep.subr.bf16.mxu0 0
    %149 = vmatpush2.bf16.msra.mxu0 0
    %150 = vmatprep.subr.bf16.mxu0 0
    %151 = vmatpush2.bf16.msra.mxu0 0
    %152 = vmatprep.mubr.bf16.mxu0 0
    %153 = vmatmul.mubr.bf16.gmra.mxu0 %v70
    %v154 = vpop.f32.mrf.mxu0
    %v155 = vadd.f32 %v64, %v154
    %v156 = vpop.f32.mrf.mxu0
    %v157 = vpop.f32.mrf.mxu0
    %v158 = vadd.f32 %v64, %v157
    %v159 = vpop.f32.mrf.mxu0
    %160 = vdwg.mxu0
    %v161 = vlaneseq
    %v162 = vand.u32 %v161, 127
    %vm163 = vcmp.lt.s32.totalorder %v162, 32
    %v164 = vtanh.pop %v155
    %v165 = vtanh.pop %v158
    %v166 = vsel %vm163, %v164, %v155
    %v167 = vsel %vm163, %v165, %v158
    %v168 = vpack.c.bf16 %v167, %v166
    %v169 = vld [vmem:[%s3] sm:$0xff]
    %v170 = vld [vmem:[%s3 + $0x8] sm:$0xff]
    %v171 = vld [vmem:[%s3 + $0x10] sm:$0xff]
    %v172 = vld [vmem:[%s3 + $0x18] sm:$0xff]
    %v173 = vld [vmem:[%s3 + $0x20] sm:$0xff]
    %v174 = vld [vmem:[%s3 + $0x28] sm:$0xff]
    %v175 = vld [vmem:[%s3 + $0x30] sm:$0xff]
    %v176 = vld [vmem:[%s3 + $0x38] sm:$0xff]
    %v177 = vld [vmem:[%s3 + $0x40] sm:$0xff]
    %v178 = vld [vmem:[%s3 + $0x48] sm:$0xff]
    %v179 = vld [vmem:[%s3 + $0x50] sm:$0xff]
    %v180 = vld [vmem:[%s3 + $0x58] sm:$0xff]
    %v181 = vld [vmem:[%s3 + $0x60] sm:$0xff]
    %v182 = vld [vmem:[%s3 + $0x68] sm:$0xff]
    %v183 = vld [vmem:[%s3 + $0x70] sm:$0xff]
    %v184 = vld [vmem:[%s3 + $0x78] sm:$0xff]
    %v185 = vld [vmem:[%s3 + $0x80] sm:$0xff]
    %v186 = vld [vmem:[%s3 + $0x88] sm:$0xff]
    %v187 = vld [vmem:[%s3 + $0x90] sm:$0xff]
    %v188 = vld [vmem:[%s3 + $0x98] sm:$0xff]
    %v189 = vld [vmem:[%s3 + $0xa0] sm:$0xff]
    %v190 = vld [vmem:[%s3 + $0xa8] sm:$0xff]
    %v191 = vld [vmem:[%s3 + $0xb0] sm:$0xff]
    %v192 = vld [vmem:[%s3 + $0xb8] sm:$0xff]
    %v193 = vld [vmem:[%s3 + $0xc0] sm:$0xff]
    %v194 = vld [vmem:[%s3 + $0xc8] sm:$0xff]
    %v195 = vld [vmem:[%s3 + $0xd0] sm:$0xff]
    %v196 = vld [vmem:[%s3 + $0xd8] sm:$0xff]
    %v197 = vld [vmem:[%s3 + $0xe0] sm:$0xff]
    %v198 = vld [vmem:[%s3 + $0xe8] sm:$0xff]
    %v199 = vld [vmem:[%s3 + $0xf0] sm:$0xff]
    %v200 = vld [vmem:[%s3 + $0xf8] sm:$0xff]
    %v201 = vld [vmem:[%s4] sm:$0xf]
    %v203 = vlaneseq
    %v204 = vshrl.u32 %v203, 7
    %v205 = vsub.s32 0, %v204
    %v206 = vrot.slane %v201, %v205
    %v207 = vlaneseq
    %v208 = vshrl.u32 %v207, 7
    %v209 = vsub.s32 1, %v208
    %v210 = vrot.slane %v201, %v209
    %v211 = vlaneseq
    %v212 = vshrl.u32 %v211, 7
    %v213 = vsub.s32 2, %v212
    %v214 = vrot.slane %v201, %v213
    %v215 = vlaneseq
    %v216 = vshrl.u32 %v215, 7
    %v217 = vsub.s32 3, %v216
    %v218 = vrot.slane %v201, %v217
    %v255 = vunpack.c.l.b16 %v169
    %v256 = vunpack.c.h.b16 %v169
    %v257 = vunpack.c.l.b16 %v170
    %v258 = vunpack.c.h.b16 %v170
    %v259 = vunpack.c.l.b16 %v171
    %v260 = vunpack.c.h.b16 %v171
    %v261 = vunpack.c.l.b16 %v172
    %v262 = vunpack.c.h.b16 %v172
    %v263 = vunpack.c.l.b16 %v173
    %v264 = vunpack.c.h.b16 %v173
    %v265 = vunpack.c.l.b16 %v174
    %v266 = vunpack.c.h.b16 %v174
    %v267 = vunpack.c.l.b16 %v175
    %v268 = vunpack.c.h.b16 %v175
    %v269 = vunpack.c.l.b16 %v176
    %v270 = vunpack.c.h.b16 %v176
    %v271 = vunpack.c.l.b16 %v177
    %v272 = vunpack.c.h.b16 %v177
    %v273 = vunpack.c.l.b16 %v178
    %v274 = vunpack.c.h.b16 %v178
    %v275 = vunpack.c.l.b16 %v179
    %v276 = vunpack.c.h.b16 %v179
    %v277 = vunpack.c.l.b16 %v180
    %v278 = vunpack.c.h.b16 %v180
    %v279 = vunpack.c.l.b16 %v181
    %v280 = vunpack.c.h.b16 %v181
    %v281 = vunpack.c.l.b16 %v182
    %v282 = vunpack.c.h.b16 %v182
    %v283 = vunpack.c.l.b16 %v183
    %v284 = vunpack.c.h.b16 %v183
    %v285 = vunpack.c.l.b16 %v184
    %v286 = vunpack.c.h.b16 %v184
    %v287 = vunpack.c.l.b16 %v185
    %v288 = vunpack.c.h.b16 %v185
    %v289 = vunpack.c.l.b16 %v186
    %v290 = vunpack.c.h.b16 %v186
    %v291 = vunpack.c.l.b16 %v187
    %v292 = vunpack.c.h.b16 %v187
    %v293 = vunpack.c.l.b16 %v188
    %v294 = vunpack.c.h.b16 %v188
    %v295 = vunpack.c.l.b16 %v189
    %v296 = vunpack.c.h.b16 %v189
    %v297 = vunpack.c.l.b16 %v190
    %v298 = vunpack.c.h.b16 %v190
    %v299 = vunpack.c.l.b16 %v191
    %v300 = vunpack.c.h.b16 %v191
    %v301 = vunpack.c.l.b16 %v192
    %v302 = vunpack.c.h.b16 %v192
    %v303 = vunpack.c.l.b16 %v193
    %v304 = vunpack.c.h.b16 %v193
    %v305 = vunpack.c.l.b16 %v194
    %v306 = vunpack.c.h.b16 %v194
    %v307 = vunpack.c.l.b16 %v195
    %v308 = vunpack.c.h.b16 %v195
    %v309 = vunpack.c.l.b16 %v196
    %v310 = vunpack.c.h.b16 %v196
    %v311 = vunpack.c.l.b16 %v197
    %v312 = vunpack.c.h.b16 %v197
    %v313 = vunpack.c.l.b16 %v198
    %v314 = vunpack.c.h.b16 %v198
    %v315 = vunpack.c.l.b16 %v199
    %v316 = vunpack.c.h.b16 %v199
    %v317 = vunpack.c.l.b16 %v200
    %v318 = vunpack.c.h.b16 %v200
    %v319 = vpack.c.b16 %v259, %v255
    %v320 = vpack.c.b16 %v260, %v256
    %v321 = vpack.c.b16 %v261, %v257
    %v322 = vpack.c.b16 %v262, %v258
    %v323 = vpack.c.b16 %v267, %v263
    %v324 = vpack.c.b16 %v268, %v264
    %v325 = vpack.c.b16 %v269, %v265
    %v326 = vpack.c.b16 %v270, %v266
    %v327 = vpack.c.b16 %v275, %v271
    %v328 = vpack.c.b16 %v276, %v272
    %v329 = vpack.c.b16 %v277, %v273
    %v330 = vpack.c.b16 %v278, %v274
    %v331 = vpack.c.b16 %v283, %v279
    %v332 = vpack.c.b16 %v284, %v280
    %v333 = vpack.c.b16 %v285, %v281
    %v334 = vpack.c.b16 %v286, %v282
    %v335 = vpack.c.b16 %v291, %v287
    %v336 = vpack.c.b16 %v292, %v288
    %v337 = vpack.c.b16 %v293, %v289
    %v338 = vpack.c.b16 %v294, %v290
    %v339 = vpack.c.b16 %v299, %v295
    %v340 = vpack.c.b16 %v300, %v296
    %v341 = vpack.c.b16 %v301, %v297
    %v342 = vpack.c.b16 %v302, %v298
    %v343 = vpack.c.b16 %v307, %v303
    %v344 = vpack.c.b16 %v308, %v304
    %v345 = vpack.c.b16 %v309, %v305
    %v346 = vpack.c.b16 %v310, %v306
    %v347 = vpack.c.b16 %v315, %v311
    %v348 = vpack.c.b16 %v316, %v312
    %v349 = vpack.c.b16 %v317, %v313
    %v350 = vpack.c.b16 %v318, %v314
    %383 = vmatprep.subr.bf16.mxu0 %v348
    %384 = vmatpush1.bf16.msra.mxu0 %v347
    %385 = vmatprep.subr.bf16.mxu0 %v344
    %386 = vmatpush1.bf16.msra.mxu0 %v343
    %387 = vmatprep.subr.bf16.mxu0 %v340
    %388 = vmatpush1.bf16.msra.mxu0 %v339
    %389 = vmatprep.subr.bf16.mxu0 %v336
    %390 = vmatpush1.bf16.msra.mxu0 %v335
    %391 = vmatprep.subr.bf16.mxu0 %v332
    %392 = vmatpush1.bf16.msra.mxu0 %v331
    %393 = vmatprep.subr.bf16.mxu0 %v328
    %394 = vmatpush1.bf16.msra.mxu0 %v327
    %395 = vmatprep.subr.bf16.mxu0 %v324
    %396 = vmatpush1.bf16.msra.mxu0 %v323
    %397 = vmatprep.subr.bf16.mxu0 %v320
    %398 = vmatpush1.bf16.msra.mxu0 %v319
    %399 = vmatprep.subr.bf16.mxu0 0
    %400 = vmatpush2.bf16.msra.mxu0 0
    %401 = vmatprep.subr.bf16.mxu0 0
    %402 = vmatpush2.bf16.msra.mxu0 0
    %403 = vmatprep.subr.bf16.mxu0 0
    %404 = vmatpush2.bf16.msra.mxu0 0
    %405 = vmatprep.subr.bf16.mxu0 0
    %406 = vmatpush2.bf16.msra.mxu0 0
    %407 = vmatprep.subr.bf16.mxu0 0
    %408 = vmatpush2.bf16.msra.mxu0 0
    %409 = vmatprep.subr.bf16.mxu0 0
    %410 = vmatpush2.bf16.msra.mxu0 0
    %411 = vmatprep.subr.bf16.mxu0 0
    %412 = vmatpush2.bf16.msra.mxu0 0
    %413 = vmatprep.subr.bf16.mxu0 0
    %414 = vmatpush2.bf16.msra.mxu0 0
    %415 = vmatprep.mubr.bf16.mxu0 0
    %416 = vmatmul.mubr.bf16.gmra.mxu0 %v168
    %v417 = vpop.f32.mrf.mxu0
    %v418 = vadd.f32 %v206, %v417
    %v419 = vpop.f32.mrf.mxu0
    %v420 = vadd.f32 %v210, %v419
    %v421 = vpop.f32.mrf.mxu0
    %v422 = vadd.f32 %v206, %v421
    %v423 = vpop.f32.mrf.mxu0
    %v424 = vadd.f32 %v210, %v423
    %425 = vdwg.mxu0
    %426 = vmatprep.subr.bf16.mxu0 %v350
    %427 = vmatpush1.bf16.msra.mxu0 %v349
    %428 = vmatprep.subr.bf16.mxu0 %v346
    %429 = vmatpush1.bf16.msra.mxu0 %v345
    %430 = vmatprep.subr.bf16.mxu0 %v342
    %431 = vmatpush1.bf16.msra.mxu0 %v341
    %432 = vmatprep.subr.bf16.mxu0 %v338
    %433 = vmatpush1.bf16.msra.mxu0 %v337
    %434 = vmatprep.subr.bf16.mxu0 %v334
    %435 = vmatpush1.bf16.msra.mxu0 %v333
    %436 = vmatprep.subr.bf16.mxu0 %v330
    %437 = vmatpush1.bf16.msra.mxu0 %v329
    %438 = vmatprep.subr.bf16.mxu0 %v326
    %439 = vmatpush1.bf16.msra.mxu0 %v325
    %440 = vmatprep.subr.bf16.mxu0 %v322
    %441 = vmatpush1.bf16.msra.mxu0 %v321
    %442 = vmatprep.subr.bf16.mxu0 0
    %443 = vmatpush2.bf16.msra.mxu0 0
    %444 = vmatprep.subr.bf16.mxu0 0
    %445 = vmatpush2.bf16.msra.mxu0 0
    %446 = vmatprep.subr.bf16.mxu0 0
    %447 = vmatpush2.bf16.msra.mxu0 0
    %448 = vmatprep.subr.bf16.mxu0 0
    %449 = vmatpush2.bf16.msra.mxu0 0
    %450 = vmatprep.subr.bf16.mxu0 0
    %451 = vmatpush2.bf16.msra.mxu0 0
    %452 = vmatprep.subr.bf16.mxu0 0
    %453 = vmatpush2.bf16.msra.mxu0 0
    %454 = vmatprep.subr.bf16.mxu0 0
    %455 = vmatpush2.bf16.msra.mxu0 0
    %456 = vmatprep.subr.bf16.mxu0 0
    %457 = vmatpush2.bf16.msra.mxu0 0
    %458 = vmatprep.mubr.bf16.mxu0 0
    %459 = vmatmul.mubr.bf16.gmra.mxu0 %v168
    %v460 = vpop.f32.mrf.mxu0
    %v461 = vadd.f32 %v214, %v460
    %v462 = vpop.f32.mrf.mxu0
    %v463 = vadd.f32 %v218, %v462
    %v464 = vpop.f32.mrf.mxu0
    %v465 = vadd.f32 %v214, %v464
    %v466 = vpop.f32.mrf.mxu0
    %v467 = vadd.f32 %v218, %v466
    %468 = vdwg.mxu0
    %v469 = vmax.f32 %v418, 0.0
    %v470 = vmax.f32 %v420, 0.0
    %v471 = vmax.f32 %v461, 0.0
    %v472 = vmax.f32 %v463, 0.0
    %v473 = vmax.f32 %v422, 0.0
    %v474 = vmax.f32 %v424, 0.0
    %v475 = vmax.f32 %v465, 0.0
    %v476 = vmax.f32 %v467, 0.0
    %v477 = vpack.c.bf16 %v473, %v469
    %v478 = vpack.c.bf16 %v474, %v470
    %v479 = vpack.c.bf16 %v475, %v471
    %v480 = vpack.c.bf16 %v476, %v472
    %v481 = vld [vmem:[%s5] sm:$0xf]
    %v482 = vld [vmem:[%s5 + $0x4] sm:$0xf]
    %v483 = vld [vmem:[%s5 + $0x8] sm:$0xf]
    %v484 = vld [vmem:[%s5 + $0xc] sm:$0xf]
    %v485 = vld [vmem:[%s5 + $0x10] sm:$0xf]
    %v486 = vld [vmem:[%s5 + $0x14] sm:$0xf]
    %v487 = vld [vmem:[%s5 + $0x18] sm:$0xf]
    %v488 = vld [vmem:[%s5 + $0x1c] sm:$0xf]
    %v489 = vld [vmem:[%s5 + $0x20] sm:$0xf]
    %v490 = vld [vmem:[%s5 + $0x24] sm:$0xf]
    %v491 = vld [vmem:[%s5 + $0x28] sm:$0xf]
    %v492 = vld [vmem:[%s5 + $0x2c] sm:$0xf]
    %v493 = vld [vmem:[%s5 + $0x30] sm:$0xf]
    %v494 = vld [vmem:[%s5 + $0x34] sm:$0xf]
    %v495 = vld [vmem:[%s5 + $0x38] sm:$0xf]
    %v496 = vld [vmem:[%s5 + $0x3c] sm:$0xf]
    %v497 = vld [vmem:[%s5 + $0x40] sm:$0xf]
    %v498 = vld [vmem:[%s5 + $0x44] sm:$0xf]
    %v499 = vld [vmem:[%s5 + $0x48] sm:$0xf]
    %v500 = vld [vmem:[%s5 + $0x4c] sm:$0xf]
    %v501 = vld [vmem:[%s5 + $0x50] sm:$0xf]
    %v502 = vld [vmem:[%s5 + $0x54] sm:$0xf]
    %v503 = vld [vmem:[%s5 + $0x58] sm:$0xf]
    %v504 = vld [vmem:[%s5 + $0x5c] sm:$0xf]
    %v505 = vld [vmem:[%s5 + $0x60] sm:$0xf]
    %v506 = vld [vmem:[%s5 + $0x64] sm:$0xf]
    %v507 = vld [vmem:[%s5 + $0x68] sm:$0xf]
    %v508 = vld [vmem:[%s5 + $0x6c] sm:$0xf]
    %v509 = vld [vmem:[%s5 + $0x70] sm:$0xf]
    %v510 = vld [vmem:[%s5 + $0x74] sm:$0xf]
    %v511 = vld [vmem:[%s5 + $0x78] sm:$0xf]
    %v512 = vld [vmem:[%s5 + $0x7c] sm:$0xf]
    %v513 = vld [vmem:[%s5 + $0x80] sm:$0xf]
    %v514 = vld [vmem:[%s5 + $0x84] sm:$0xf]
    %v515 = vld [vmem:[%s5 + $0x88] sm:$0xf]
    %v516 = vld [vmem:[%s5 + $0x8c] sm:$0xf]
    %v517 = vld [vmem:[%s5 + $0x90] sm:$0xf]
    %v518 = vld [vmem:[%s5 + $0x94] sm:$0xf]
    %v519 = vld [vmem:[%s5 + $0x98] sm:$0xf]
    %v520 = vld [vmem:[%s5 + $0x9c] sm:$0xf]
    %v521 = vld [vmem:[%s5 + $0xa0] sm:$0xf]
    %v522 = vld [vmem:[%s5 + $0xa4] sm:$0xf]
    %v523 = vld [vmem:[%s5 + $0xa8] sm:$0xf]
    %v524 = vld [vmem:[%s5 + $0xac] sm:$0xf]
    %v525 = vld [vmem:[%s5 + $0xb0] sm:$0xf]
    %v526 = vld [vmem:[%s5 + $0xb4] sm:$0xf]
    %v527 = vld [vmem:[%s5 + $0xb8] sm:$0xf]
    %v528 = vld [vmem:[%s5 + $0xbc] sm:$0xf]
    %v529 = vld [vmem:[%s5 + $0xc0] sm:$0xf]
    %v530 = vld [vmem:[%s5 + $0xc4] sm:$0xf]
    %v531 = vld [vmem:[%s5 + $0xc8] sm:$0xf]
    %v532 = vld [vmem:[%s5 + $0xcc] sm:$0xf]
    %v533 = vld [vmem:[%s5 + $0xd0] sm:$0xf]
    %v534 = vld [vmem:[%s5 + $0xd4] sm:$0xf]
    %v535 = vld [vmem:[%s5 + $0xd8] sm:$0xf]
    %v536 = vld [vmem:[%s5 + $0xdc] sm:$0xf]
    %v537 = vld [vmem:[%s5 + $0xe0] sm:$0xf]
    %v538 = vld [vmem:[%s5 + $0xe4] sm:$0xf]
    %v539 = vld [vmem:[%s5 + $0xe8] sm:$0xf]
    %v540 = vld [vmem:[%s5 + $0xec] sm:$0xf]
    %v541 = vld [vmem:[%s5 + $0xf0] sm:$0xf]
    %v542 = vld [vmem:[%s5 + $0xf4] sm:$0xf]
    %v543 = vld [vmem:[%s5 + $0xf8] sm:$0xf]
    %v544 = vld [vmem:[%s5 + $0xfc] sm:$0xf]
    %v545 = vld [vmem:[%s6] sm:$0x1]
    %v547 = vlaneseq
    %v548 = vshrl.u32 %v547, 7
    %v549 = vsub.s32 0, %v548
    %v550 = vrot.slane %v545, %v549
    %v616 = vunpack.c.l.b16 %v481
    %v617 = vunpack.c.l.b16 %v482
    %v618 = vunpack.c.l.b16 %v483
    %v619 = vunpack.c.l.b16 %v484
    %v620 = vunpack.c.l.b16 %v485
    %v621 = vunpack.c.l.b16 %v486
    %v622 = vunpack.c.l.b16 %v487
    %v623 = vunpack.c.l.b16 %v488
    %v624 = vunpack.c.l.b16 %v489
    %v625 = vunpack.c.l.b16 %v490
    %v626 = vunpack.c.l.b16 %v491
    %v627 = vunpack.c.l.b16 %v492
    %v628 = vunpack.c.l.b16 %v493
    %v629 = vunpack.c.l.b16 %v494
    %v630 = vunpack.c.l.b16 %v495
    %v631 = vunpack.c.l.b16 %v496
    %v632 = vunpack.c.l.b16 %v497
    %v633 = vunpack.c.l.b16 %v498
    %v634 = vunpack.c.l.b16 %v499
    %v635 = vunpack.c.l.b16 %v500
    %v636 = vunpack.c.l.b16 %v501
    %v637 = vunpack.c.l.b16 %v502
    %v638 = vunpack.c.l.b16 %v503
    %v639 = vunpack.c.l.b16 %v504
    %v640 = vunpack.c.l.b16 %v505
    %v641 = vunpack.c.l.b16 %v506
    %v642 = vunpack.c.l.b16 %v507
    %v643 = vunpack.c.l.b16 %v508
    %v644 = vunpack.c.l.b16 %v509
    %v645 = vunpack.c.l.b16 %v510
    %v646 = vunpack.c.l.b16 %v511
    %v647 = vunpack.c.l.b16 %v512
    %v648 = vunpack.c.l.b16 %v513
    %v649 = vunpack.c.l.b16 %v514
    %v650 = vunpack.c.l.b16 %v515
    %v651 = vunpack.c.l.b16 %v516
    %v652 = vunpack.c.l.b16 %v517
    %v653 = vunpack.c.l.b16 %v518
    %v654 = vunpack.c.l.b16 %v519
    %v655 = vunpack.c.l.b16 %v520
    %v656 = vunpack.c.l.b16 %v521
    %v657 = vunpack.c.l.b16 %v522
    %v658 = vunpack.c.l.b16 %v523
    %v659 = vunpack.c.l.b16 %v524
    %v660 = vunpack.c.l.b16 %v525
    %v661 = vunpack.c.l.b16 %v526
    %v662 = vunpack.c.l.b16 %v527
    %v663 = vunpack.c.l.b16 %v528
    %v664 = vunpack.c.l.b16 %v529
    %v665 = vunpack.c.l.b16 %v530
    %v666 = vunpack.c.l.b16 %v531
    %v667 = vunpack.c.l.b16 %v532
    %v668 = vunpack.c.l.b16 %v533
    %v669 = vunpack.c.l.b16 %v534
    %v670 = vunpack.c.l.b16 %v535
    %v671 = vunpack.c.l.b16 %v536
    %v672 = vunpack.c.l.b16 %v537
    %v673 = vunpack.c.l.b16 %v538
    %v674 = vunpack.c.l.b16 %v539
    %v675 = vunpack.c.l.b16 %v540
    %v676 = vunpack.c.l.b16 %v541
    %v677 = vunpack.c.l.b16 %v542
    %v678 = vunpack.c.l.b16 %v543
    %v679 = vunpack.c.l.b16 %v544
    %v680 = vpack.c.b16 %v617, %v616
    %v681 = vpack.c.b16 %v619, %v618
    %v682 = vpack.c.b16 %v621, %v620
    %v683 = vpack.c.b16 %v623, %v622
    %v684 = vpack.c.b16 %v625, %v624
    %v685 = vpack.c.b16 %v627, %v626
    %v686 = vpack.c.b16 %v629, %v628
    %v687 = vpack.c.b16 %v631, %v630
    %v688 = vpack.c.b16 %v633, %v632
    %v689 = vpack.c.b16 %v635, %v634
    %v690 = vpack.c.b16 %v637, %v636
    %v691 = vpack.c.b16 %v639, %v638
    %v692 = vpack.c.b16 %v641, %v640
    %v693 = vpack.c.b16 %v643, %v642
    %v694 = vpack.c.b16 %v645, %v644
    %v695 = vpack.c.b16 %v647, %v646
    %v696 = vpack.c.b16 %v649, %v648
    %v697 = vpack.c.b16 %v651, %v650
    %v698 = vpack.c.b16 %v653, %v652
    %v699 = vpack.c.b16 %v655, %v654
    %v700 = vpack.c.b16 %v657, %v656
    %v701 = vpack.c.b16 %v659, %v658
    %v702 = vpack.c.b16 %v661, %v660
    %v703 = vpack.c.b16 %v663, %v662
    %v704 = vpack.c.b16 %v665, %v664
    %v705 = vpack.c.b16 %v667, %v666
    %v706 = vpack.c.b16 %v669, %v668
    %v707 = vpack.c.b16 %v671, %v670
    %v708 = vpack.c.b16 %v673, %v672
    %v709 = vpack.c.b16 %v675, %v674
    %v710 = vpack.c.b16 %v677, %v676
    %v711 = vpack.c.b16 %v679, %v678
    %744 = vmatprep.subr.bf16.mxu0 0
    %745 = vmatpush1.bf16.msra.mxu0 %v687
    %746 = vmatprep.subr.bf16.mxu0 0
    %747 = vmatpush1.bf16.msra.mxu0 %v686
    %748 = vmatprep.subr.bf16.mxu0 0
    %749 = vmatpush1.bf16.msra.mxu0 %v685
    %750 = vmatprep.subr.bf16.mxu0 0
    %751 = vmatpush1.bf16.msra.mxu0 %v684
    %752 = vmatprep.subr.bf16.mxu0 0
    %753 = vmatpush1.bf16.msra.mxu0 %v683
    %754 = vmatprep.subr.bf16.mxu0 0
    %755 = vmatpush1.bf16.msra.mxu0 %v682
    %756 = vmatprep.subr.bf16.mxu0 0
    %757 = vmatpush1.bf16.msra.mxu0 %v681
    %758 = vmatprep.subr.bf16.mxu0 0
    %759 = vmatpush1.bf16.msra.mxu0 %v680
    %760 = vmatprep.subr.bf16.mxu0 0
    %761 = vmatpush2.bf16.msra.mxu0 %v695
    %762 = vmatprep.subr.bf16.mxu0 0
    %763 = vmatpush2.bf16.msra.mxu0 %v694
    %764 = vmatprep.subr.bf16.mxu0 0
    %765 = vmatpush2.bf16.msra.mxu0 %v693
    %766 = vmatprep.subr.bf16.mxu0 0
    %767 = vmatpush2.bf16.msra.mxu0 %v692
    %768 = vmatprep.subr.bf16.mxu0 0
    %769 = vmatpush2.bf16.msra.mxu0 %v691
    %770 = vmatprep.subr.bf16.mxu0 0
    %771 = vmatpush2.bf16.msra.mxu0 %v690
    %772 = vmatprep.subr.bf16.mxu0 0
    %773 = vmatpush2.bf16.msra.mxu0 %v689
    %774 = vmatprep.subr.bf16.mxu0 0
    %775 = vmatpush2.bf16.msra.mxu0 %v688
    %776 = vmatprep.mubr.bf16.mxu0 %v478
    %777 = vmatmul.mubr.bf16.gmra.mxu0 %v477
    %v778 = vpop.f32.mrf.mxu0
    %v779 = vadd.f32 %v550, %v778
    %v780 = vpop.f32.mrf.mxu0
    %v781 = vpop.f32.mrf.mxu0
    %v782 = vadd.f32 %v550, %v781
    %v783 = vpop.f32.mrf.mxu0
    %784 = vdwg.mxu0
    %785 = vmatprep.subr.bf16.mxu0 0
    %786 = vmatpush1.bf16.msra.mxu0 %v703
    %787 = vmatprep.subr.bf16.mxu0 0
    %788 = vmatpush1.bf16.msra.mxu0 %v702
    %789 = vmatprep.subr.bf16.mxu0 0
    %790 = vmatpush1.bf16.msra.mxu0 %v701
    %791 = vmatprep.subr.bf16.mxu0 0
    %792 = vmatpush1.bf16.msra.mxu0 %v700
    %793 = vmatprep.subr.bf16.mxu0 0
    %794 = vmatpush1.bf16.msra.mxu0 %v699
    %795 = vmatprep.subr.bf16.mxu0 0
    %796 = vmatpush1.bf16.msra.mxu0 %v698
    %797 = vmatprep.subr.bf16.mxu0 0
    %798 = vmatpush1.bf16.msra.mxu0 %v697
    %799 = vmatprep.subr.bf16.mxu0 0
    %800 = vmatpush1.bf16.msra.mxu0 %v696
    %801 = vmatprep.subr.bf16.mxu0 0
    %802 = vmatpush2.bf16.msra.mxu0 %v711
    %803 = vmatprep.subr.bf16.mxu0 0
    %804 = vmatpush2.bf16.msra.mxu0 %v710
    %805 = vmatprep.subr.bf16.mxu0 0
    %806 = vmatpush2.bf16.msra.mxu0 %v709
    %807 = vmatprep.subr.bf16.mxu0 0
    %808 = vmatpush2.bf16.msra.mxu0 %v708
    %809 = vmatprep.subr.bf16.mxu0 0
    %810 = vmatpush2.bf16.msra.mxu0 %v707
    %811 = vmatprep.subr.bf16.mxu0 0
    %812 = vmatpush2.bf16.msra.mxu0 %v706
    %813 = vmatprep.subr.bf16.mxu0 0
    %814 = vmatpush2.bf16.msra.mxu0 %v705
    %815 = vmatprep.subr.bf16.mxu0 0
    %816 = vmatpush2.bf16.msra.mxu0 %v704
    %817 = vmatprep.mubr.bf16.mxu0 %v480
    %818 = vmatmul.mubr.bf16.gmra.mxu0 %v479
    %v819 = vpop.f32.mrf.mxu0
    %v820 = vadd.f32 %v779, %v819
    %v821 = vpop.f32.mrf.mxu0
    %v822 = vpop.f32.mrf.mxu0
    %v823 = vadd.f32 %v782, %v822
    %v824 = vpop.f32.mrf.mxu0
    %825 = vdwg.mxu0
    %vm826 = vcmask 64512
    %827 = vst.msk [vmem:[%s7] sm:$0xff] %vm826, %v820
    %828 = vst.msk [vmem:[%s7 + $0x8] sm:$0xff] %vm826, %v823
    // Predicated region
    $region34: #{emotion_classifier_head.1} parent=1 // pred_check
      _
    $region35: #{emotion_classifier_head.1} parent=1 // pred_check_branch
      %830 = sbr.rel (0) target = $region37
    $region36: #{emotion_classifier_head.1} parent=1 // pred_region
      _
    $region37: #{emotion_classifier_head.1} parent=1 // pred_fallthru
      _
    // Predicated region
    $region38: #{emotion_classifier_head.1} parent=1 // pred_check
      _
    $region39: #{emotion_classifier_head.1} parent=1 // pred_check_branch
      %832 = sbr.rel (0) target = $region41
    $region40: #{emotion_classifier_head.1} parent=1 // pred_region
      _
    $region41: #{emotion_classifier_head.1} parent=1 // pred_fallthru
      _
    %833 = vsyncpa [#allocation3], 1

</llo_original>
